<compile_context>
chip_gen: v6e
topology: v6e:2x2x1
jax: 0.10.0
libtpu: 0.0.40
codegen_flags: <defaults>
</compile_context>

<pallas_src>
import functools

import jax
import jax.numpy as jnp
from jax import lax
from jax.experimental import pallas as pl
from jax.experimental.pallas import tpu as pltpu

LANE = 128  # padded feature width for the hidden layers (lane-dense MXU tiles)


def _round_up(n, m):
    return ((n + m - 1) // m) * m


def mcts_kernel(x_ref, w_ref, b_ref, out_ref, *, num_actions, in_size, out_w):
    """Fused MLP trunk + policy/value heads.

    x_ref:   (TILE_B, Ip)     bf16 input, Ip = round_up(input_size, 8)
    w_ref:   (4, 128, 128)    bf16 zero-padded weight slab, (in, out) layout
    b_ref:   (8, 128)         f32 zero-padded bias slab (rows 0..3 used)
    out_ref: (TILE_B, out_w)  f32; cols [0, A) = policy probs, col A = value
    """
    x = x_ref[...]                         # (TILE_B, Ip) bf16
    b = b_ref[...]                         # (8, 128) f32

    # shared trunk: Linear -> ReLU -> Linear -> ReLU (f32 accumulation)
    w0 = w_ref[0]                          # (128, 128) bf16, rows >= Ip are zero
    h = jnp.dot(x, w0[:in_size, :], preferred_element_type=jnp.float32) + b[0:1, :]
    h = jnp.maximum(h, 0.0)
    h = jnp.dot(h.astype(jnp.bfloat16), w_ref[1],
                preferred_element_type=jnp.float32) + b[1:2, :]
    h = jnp.maximum(h, 0.0)

    # fused head first layer: cols [0, H/2) policy branch, [H/2, H) value branch
    hh = jnp.dot(h.astype(jnp.bfloat16), w_ref[2],
                 preferred_element_type=jnp.float32) + b[2:3, :]
    hh = jnp.maximum(hh, 0.0)

    # fused (block-diagonal) head output layer:
    #   cols [0, A) = policy logits, col A = value pre-activation, rest = 0
    o = jnp.dot(hh.astype(jnp.bfloat16), w_ref[3],
                preferred_element_type=jnp.float32) + b[3:4, :]

    col = lax.broadcasted_iota(jnp.int32, o.shape, 1)
    is_pol = col < num_actions

    # softmax over the first num_actions lanes only (max-subtracted, f32)
    o_masked = jnp.where(is_pol, o, -1e30)
    m = jnp.max(o_masked, axis=-1, keepdims=True)
    e = jnp.exp(o_masked - m)                     # masked lanes underflow to 0
    s = jnp.sum(e, axis=-1, keepdims=True)
    probs = e * pl.reciprocal(s, approx=True)     # EUP, frees VALU slot

    val = jnp.tanh(o)                             # only col == num_actions kept

    out = jnp.where(is_pol, probs, jnp.where(col == num_actions, val, 0.0))
    # Narrow store: only the meaningful columns go back to HBM.
    out_ref[...] = out[:, :out_w].astype(out_ref.dtype)


def _pad_to(a, shape):
    return jnp.pad(a, [(0, t - s) for s, t in zip(a.shape, shape)])


def _pack_params(params):
    """Pack PyTorch-shaped (out,in) params into zero-padded slabs.

    Weight slab is bf16 (MXU operands), bias slab stays f32 (epilogue).
    """
    H, I = params["w1"].shape
    half = H // 2
    A = params["wp2"].shape[0]
    assert H <= LANE and I <= LANE and A + 1 <= LANE

    # (in, out) layouts
    w1 = params["w1"].T                                                # (I, H)
    w2 = params["w2"].T                                                # (H, H)
    wh = jnp.concatenate([params["wp1"].T, params["wv1"].T], axis=1)   # (H, H)
    # block-diagonal fused output layer:
    #   rows [0, half)  (policy branch) -> cols [0, A)   via wp2
    #   rows [half, H)  (value branch)  -> col  A        via wv2
    wo = jnp.zeros((H, LANE), jnp.float32)
    wo = wo.at[:half, :A].set(params["wp2"].T)
    wo = wo.at[half:H, A:A + 1].set(params["wv2"].T)

    w_slab = jnp.stack([
        _pad_to(w1.astype(jnp.float32), (LANE, LANE)),
        _pad_to(w2.astype(jnp.float32), (LANE, LANE)),
        _pad_to(wh.astype(jnp.float32), (LANE, LANE)),
        _pad_to(wo, (LANE, LANE)),
    ]).astype(jnp.bfloat16)                                            # (4,128,128)

    b1 = _pad_to(params["b1"], (LANE,))
    b2 = _pad_to(params["b2"], (LANE,))
    bh = _pad_to(jnp.concatenate([params["bp1"], params["bv1"]]), (LANE,))
    bo = jnp.zeros((LANE,), jnp.float32).at[:A].set(params["bp2"]).at[A].set(params["bv2"][0])
    b_slab = jnp.zeros((8, LANE), jnp.float32)
    b_slab = b_slab.at[0].set(b1).at[1].set(b2).at[2].set(bh).at[3].set(bo)
    return w_slab, b_slab, A, I


def mcts_forward(x, params, *, tile_b_max=1024):
    """x: (B, input_size) float array. params: dict of PyTorch-shaped (out,in) weights."""
    B, I = x.shape
    w_slab, b_slab, A, Iw = _pack_params(params)
    assert I == Iw, "input width mismatch with w1"

    Ip = _round_up(I, 8)                 # sublane-aligned input width
    out_w = _round_up(A + 1, 8)          # narrow output slab (policy + value)

    # Waste-bounded batch tiling: never pad more than one 8-row quantum per step.
    Bp = _round_up(B, 8)
    n_steps = -(-Bp // tile_b_max)
    # v7x: 2 TensorCores share HBM — keep >= 2 grid steps when the batch is
    # large enough so the "parallel" axis can be core-sharded.
    if n_steps == 1 and Bp >= 512:
        n_steps = 2
    tile_b = _round_up(-(-Bp // n_steps), 8)
    pad_b = tile_b * n_steps

    # bf16 input in HBM: halves input DMA on top of the unpadded-width change.
    xb = x.astype(jnp.bfloat16)
    if (pad_b, Ip) == (B, I):
        x_in = xb                        # no pad kernel at all for clean shapes
    else:
        x_in = jnp.zeros((pad_b, Ip), jnp.bfloat16).at[:B, :I].set(xb)

    out = pl.pallas_call(
        functools.partial(mcts_kernel, num_actions=A, in_size=Ip, out_w=out_w),
        out_shape=jax.ShapeDtypeStruct((pad_b, out_w), jnp.float32),
        grid_spec=pltpu.PrefetchScalarGridSpec(
            num_scalar_prefetch=0,
            grid=(pad_b // tile_b,),
            in_specs=[
                # last dim equals the full array dim -> (8,128) rule satisfied
                pl.BlockSpec((tile_b, Ip), lambda i: (i, 0)),          # x tile
                pl.BlockSpec((4, LANE, LANE), lambda i: (0, 0, 0)),    # weights (resident)
                pl.BlockSpec((8, LANE), lambda i: (0, 0)),             # biases  (resident)
            ],
            out_specs=pl.BlockSpec((tile_b, out_w), lambda i: (i, 0)),
        ),
        compiler_params=pltpu.CompilerParams(
            dimension_semantics=("parallel",)),
    )(x_in, w_slab, b_slab)

    policy = out[:B, :A]
    value = out[:B, A:A + 1]
    return policy, value


def init_params(key, input_size, hidden_size, num_actions):
    """Deterministic synthetic params with PyTorch Linear shapes (out_features, in_features)."""
    shapes = {
        "w1": (hidden_size, input_size), "b1": (hidden_size,),
        "w2": (hidden_size, hidden_size), "b2": (hidden_size,),
        "wp1": (hidden_size // 2, hidden_size), "bp1": (hidden_size // 2,),
        "wp2": (num_actions, hidden_size // 2), "bp2": (num_actions,),
        "wv1": (hidden_size // 2, hidden_size), "bv1": (hidden_size // 2,),
        "wv2": (1, hidden_size // 2), "bv2": (1,),
    }
    params = {}
    keys = jax.random.split(key, len(shapes))
    for k_rng, (name, shape) in zip(keys, shapes.items()):
        fan_in = shape[-1] if len(shape) > 1 else shapes["w" + name[1:]][-1]
        bound = 1.0 / (fan_in ** 0.5)
        params[name] = jax.random.uniform(
            k_rng, shape, dtype=jnp.float32, minval=-bound, maxval=bound)
    return params


if __name__ == "__main__":
    B, INPUT_SIZE, HIDDEN_SIZE, NUM_ACTIONS = 8, 16, 32, 8

    key = jax.random.PRNGKey(0)
    k_x, k_p = jax.random.split(key)
    x = jax.random.normal(k_x, (B, INPUT_SIZE), dtype=jnp.float32)
    params = init_params(k_p, INPUT_SIZE, HIDDEN_SIZE, NUM_ACTIONS)

    policy, value = mcts_forward(x, params)
    jax.block_until_ready((policy, value))

    # Pure-JAX f32 reference of the same math (PyTorch semantics).
    def ref(x, p):
        h = jax.nn.relu(x @ p["w1"].T + p["b1"])
        h = jax.nn.relu(h @ p["w2"].T + p["b2"])
        pl_ = jax.nn.relu(h @ p["wp1"].T + p["bp1"])
        pol = jax.nn.softmax(pl_ @ p["wp2"].T + p["bp2"], axis=1)
        v = jax.nn.relu(h @ p["wv1"].T + p["bv1"])
        val = jnp.tanh(v @ p["wv2"].T + p["bv2"])
        return pol, val

    ref_policy, ref_value = ref(x, params)
    # Tolerances account for bf16 MXU operands (f32 accumulation/epilogue) and
    # pl.reciprocal(approx=True) in the softmax denominator.
    assert jnp.allclose(policy, ref_policy, atol=5e-3), "policy mismatch"
    assert jnp.allclose(value, ref_value, atol=1e-2), "value mismatch"
    assert jnp.allclose(jnp.sum(policy, axis=1), 1.0, atol=3e-3), "policy not normalized"
    assert policy.shape == (B, NUM_ACTIONS) and value.shape == (B, 1)

    print("KERNEL_OK")
</pallas_src>

<mosaic_0001>
module attributes {stable_mosaic.version = 11 : i64} {
  func.func @mcts_kernel(%arg0: i32, %arg1: memref<8x16xbf16, #tpu.memory_space<vmem>>, %arg2: memref<4x128x128xbf16, #tpu.memory_space<vmem>>, %arg3: memref<8x128xf32, #tpu.memory_space<vmem>>, %arg4: memref<8x16xf32, #tpu.memory_space<vmem>>) attributes {dimension_semantics = [#tpu.dimension_semantics<parallel>], iteration_bounds = array<i64: 1>, scalar_prefetch = 0 : i64, scratch_operands = 0 : i64, tpu.core_type = #tpu.core_type<tc>, window_params = [{transform_indices = @transform_0, window_bounds = array<i64: 8, 16>}, {pipeline_mode = #tpu.pipeline_mode<synchronous>, transform_indices = @transform_1, window_bounds = array<i64: 4, 128, 128>}, {pipeline_mode = #tpu.pipeline_mode<synchronous>, transform_indices = @transform_2, window_bounds = array<i64: 8, 128>}, {transform_indices = @transform_3, window_bounds = array<i64: 8, 16>}]} {
    %c0 = arith.constant 0 : index
    %c0_0 = arith.constant 0 : index
    %0 = vector.load %arg1[%c0, %c0_0] : memref<8x16xbf16, #tpu.memory_space<vmem>>, vector<8x16xbf16>
    %c0_1 = arith.constant 0 : index
    %c0_2 = arith.constant 0 : index
    %1 = vector.load %arg3[%c0_1, %c0_2] : memref<8x128xf32, #tpu.memory_space<vmem>>, vector<8x128xf32>
    %c0_3 = arith.constant 0 : index
    %c0_4 = arith.constant 0 : index
    %c0_5 = arith.constant 0 : index
    %2 = vector.load %arg2[%c0_3, %c0_4, %c0_5] : memref<4x128x128xbf16, #tpu.memory_space<vmem>>, vector<1x128x128xbf16>
    %3 = vector.shape_cast %2 : vector<1x128x128xbf16> to vector<128x128xbf16>
    %4 = vector.extract_strided_slice %3 {offsets = [0, 0], sizes = [16, 128], strides = [1, 1]} : vector<128x128xbf16> to vector<16x128xbf16>
    %cst = arith.constant dense<0.000000e+00> : vector<8x128xf32>
    %5 = tpu.matmul %0, %4, %cst {dimension_numbers = #tpu.dot_dimension_numbers<[1], [0], [0], [1], [0, 0, 1, 1], [], []>} : vector<8x16xbf16>, vector<16x128xbf16>, vector<8x128xf32> -> vector<8x128xf32>
    %6 = vector.extract_strided_slice %1 {offsets = [0, 0], sizes = [1, 128], strides = [1, 1]} : vector<8x128xf32> to vector<1x128xf32>
    %7 = vector.broadcast %6 : vector<1x128xf32> to vector<8x128xf32>
    %8 = arith.addf %5, %7 : vector<8x128xf32>
    %cst_6 = arith.constant 0.000000e+00 : f32
    %9 = vector.broadcast %cst_6 : f32 to vector<8x128xf32>
    %10 = arith.maximumf %8, %9 : vector<8x128xf32>
    %11 = arith.truncf %10 : vector<8x128xf32> to vector<8x128xbf16>
    %c1 = arith.constant 1 : index
    %c0_7 = arith.constant 0 : index
    %c0_8 = arith.constant 0 : index
    %12 = vector.load %arg2[%c1, %c0_7, %c0_8] : memref<4x128x128xbf16, #tpu.memory_space<vmem>>, vector<1x128x128xbf16>
    %13 = vector.shape_cast %12 : vector<1x128x128xbf16> to vector<128x128xbf16>
    %cst_9 = arith.constant dense<0.000000e+00> : vector<8x128xf32>
    %14 = tpu.matmul %11, %13, %cst_9 {dimension_numbers = #tpu.dot_dimension_numbers<[1], [0], [0], [1], [0, 0, 1, 1], [], []>} : vector<8x128xbf16>, vector<128x128xbf16>, vector<8x128xf32> -> vector<8x128xf32>
    %15 = vector.extract_strided_slice %1 {offsets = [1, 0], sizes = [1, 128], strides = [1, 1]} : vector<8x128xf32> to vector<1x128xf32>
    %16 = vector.broadcast %15 : vector<1x128xf32> to vector<8x128xf32>
    %17 = arith.addf %14, %16 : vector<8x128xf32>
    %cst_10 = arith.constant 0.000000e+00 : f32
    %18 = vector.broadcast %cst_10 : f32 to vector<8x128xf32>
    %19 = arith.maximumf %17, %18 : vector<8x128xf32>
    %20 = arith.truncf %19 : vector<8x128xf32> to vector<8x128xbf16>
    %c2 = arith.constant 2 : index
    %c0_11 = arith.constant 0 : index
    %c0_12 = arith.constant 0 : index
    %21 = vector.load %arg2[%c2, %c0_11, %c0_12] : memref<4x128x128xbf16, #tpu.memory_space<vmem>>, vector<1x128x128xbf16>
    %22 = vector.shape_cast %21 : vector<1x128x128xbf16> to vector<128x128xbf16>
    %cst_13 = arith.constant dense<0.000000e+00> : vector<8x128xf32>
    %23 = tpu.matmul %20, %22, %cst_13 {dimension_numbers = #tpu.dot_dimension_numbers<[1], [0], [0], [1], [0, 0, 1, 1], [], []>} : vector<8x128xbf16>, vector<128x128xbf16>, vector<8x128xf32> -> vector<8x128xf32>
    %24 = vector.extract_strided_slice %1 {offsets = [2, 0], sizes = [1, 128], strides = [1, 1]} : vector<8x128xf32> to vector<1x128xf32>
    %25 = vector.broadcast %24 : vector<1x128xf32> to vector<8x128xf32>
    %26 = arith.addf %23, %25 : vector<8x128xf32>
    %cst_14 = arith.constant 0.000000e+00 : f32
    %27 = vector.broadcast %cst_14 : f32 to vector<8x128xf32>
    %28 = arith.maximumf %26, %27 : vector<8x128xf32>
    %29 = arith.truncf %28 : vector<8x128xf32> to vector<8x128xbf16>
    %c3 = arith.constant 3 : index
    %c0_15 = arith.constant 0 : index
    %c0_16 = arith.constant 0 : index
    %30 = vector.load %arg2[%c3, %c0_15, %c0_16] : memref<4x128x128xbf16, #tpu.memory_space<vmem>>, vector<1x128x128xbf16>
    %31 = vector.shape_cast %30 : vector<1x128x128xbf16> to vector<128x128xbf16>
    %cst_17 = arith.constant dense<0.000000e+00> : vector<8x128xf32>
    %32 = tpu.matmul %29, %31, %cst_17 {dimension_numbers = #tpu.dot_dimension_numbers<[1], [0], [0], [1], [0, 0, 1, 1], [], []>} : vector<8x128xbf16>, vector<128x128xbf16>, vector<8x128xf32> -> vector<8x128xf32>
    %33 = vector.extract_strided_slice %1 {offsets = [3, 0], sizes = [1, 128], strides = [1, 1]} : vector<8x128xf32> to vector<1x128xf32>
    %34 = vector.broadcast %33 : vector<1x128xf32> to vector<8x128xf32>
    %35 = arith.addf %32, %34 : vector<8x128xf32>
    %36 = tpu.iota {dimensions = array<i32: 1>} : vector<8x128xi32>
    %c8_i32 = arith.constant 8 : i32
    %37 = vector.broadcast %c8_i32 : i32 to vector<8x128xi32>
    %38 = arith.cmpi slt, %36, %37 : vector<8x128xi32>
    %cst_18 = arith.constant -1.000000e+30 : f32
    %39 = vector.broadcast %cst_18 : f32 to vector<8x128xf32>
    %40 = arith.select %38, %35, %39 : vector<8x128xi1>, vector<8x128xf32>
    %cst_19 = arith.constant dense<0xFF800000> : vector<8xf32>
    %41 = vector.multi_reduction <maximumf>, %40, %cst_19 [1] : vector<8x128xf32> to vector<8xf32>
    %42 = vector.shape_cast %41 : vector<8xf32> to vector<8x1xf32>
    %43 = vector.broadcast %42 : vector<8x1xf32> to vector<8x128xf32>
    %44 = arith.subf %40, %43 : vector<8x128xf32>
    %45 = math.exp %44 : vector<8x128xf32>
    %cst_20 = arith.constant dense<0.000000e+00> : vector<8xf32>
    %46 = vector.multi_reduction <add>, %45, %cst_20 [1] : vector<8x128xf32> to vector<8xf32>
    %47 = vector.shape_cast %46 : vector<8xf32> to vector<8x1xf32>
    %48 = tpu.reciprocal %47 {approx = true} : vector<8x1xf32> -> vector<8x1xf32>
    %49 = vector.broadcast %48 : vector<8x1xf32> to vector<8x128xf32>
    %50 = arith.mulf %45, %49 : vector<8x128xf32>
    %51 = math.tanh %35 : vector<8x128xf32>
    %c8_i32_21 = arith.constant 8 : i32
    %52 = vector.broadcast %c8_i32_21 : i32 to vector<8x128xi32>
    %53 = arith.cmpi eq, %36, %52 : vector<8x128xi32>
    %cst_22 = arith.constant 0.000000e+00 : f32
    %54 = vector.broadcast %cst_22 : f32 to vector<8x128xf32>
    %55 = arith.select %53, %51, %54 : vector<8x128xi1>, vector<8x128xf32>
    %56 = arith.select %38, %50, %55 : vector<8x128xi1>, vector<8x128xf32>
    %57 = vector.extract_strided_slice %56 {offsets = [0, 0], sizes = [8, 16], strides = [1, 1]} : vector<8x128xf32> to vector<8x16xf32>
    %c0_23 = arith.constant 0 : index
    %c0_24 = arith.constant 0 : index
    %58 = vector.load %arg4[%c0_23, %c0_24] : memref<8x16xf32, #tpu.memory_space<vmem>>, vector<8x16xf32>
    tpu.vector_store %arg4[%c0_23, %c0_24], %57 {strides = array<i32>} : memref<8x16xf32, #tpu.memory_space<vmem>>, vector<8x16xf32>,
    return
  }
  func.func @transform_0(%arg0: i32) -> (i32, i32) {
    %c0_i32 = arith.constant 0 : i32
    %c0_i32_0 = arith.constant 0 : i32
    return %arg0, %c0_i32 : i32, i32
  }
  func.func @transform_1(%arg0: i32) -> (i32, i32, i32) {
    %c0_i32 = arith.constant 0 : i32
    %c0_i32_0 = arith.constant 0 : i32
    %c0_i32_1 = arith.constant 0 : i32
    %c0_i32_2 = arith.constant 0 : i32
    return %c0_i32, %c0_i32_0, %c0_i32_1 : i32, i32, i32
  }
  func.func @transform_2(%arg0: i32) -> (i32, i32) {
    %c0_i32 = arith.constant 0 : i32
    %c0_i32_0 = arith.constant 0 : i32
    %c0_i32_1 = arith.constant 0 : i32
    return %c0_i32, %c0_i32_0 : i32, i32
  }
  func.func @transform_3(%arg0: i32) -> (i32, i32) {
    %c0_i32 = arith.constant 0 : i32
    %c0_i32_0 = arith.constant 0 : i32
    return %arg0, %c0_i32 : i32, i32
  }
}

</mosaic_0001>

<llo_original>
// kernel: tpu_custom_call.1
$region0: #{tpu_custom_call.1}
  #allocation0 [shape = 'u32[]', space=smem, size = 0x4, offset = 0x4, fixed_abs, tag = 'smem constant byte address 0x4 - core index']
  #allocation1 [shape = 'u32[144,128]{1,0:T(1,128)}', space=vmem, size = 0x12000, scoped, tag = 'internal scratch']
  %s0 = inlined_call_operand.hbm [shape: bf16[8,16], index: 0, kind: input, shape index: {}]
  %s1 = inlined_call_operand.hbm [shape: bf16[4,128,128], index: 1, kind: input, shape index: {}]
  %s2 = inlined_call_operand.hbm [shape: f32[8,128], index: 2, kind: input, shape index: {}]
  %s3 = inlined_call_operand.hbm [shape: f32[8,16], index: 3, kind: output, shape index: {}]
  %s4 = sld [smem:[#allocation0]]
  $region34: #{tpu_custom_call.1} parent=0
    _
  %s6 = ssub.s32 1, %s4
  %s7 = scalar_select 0, %s6, %s4
  $region1: #{tpu_custom_call.1} parent=0
    #allocation2 [shape = 'u8[2048]{0}', space=vmem, size = 0x800, scoped, tag = 'input window, operand 0, single buffered']
    #allocation3 [shape = 's32[1]{0}', space=sflag, size = 0x4, scoped, tag = 'scoped memory for tpu_custom_call.1']
    #allocation4 [shape = 's32[1]{0}', space=sflag, size = 0x4, scoped, tag = 'scoped memory for tpu_custom_call.1']
    #allocation5 [shape = 'u8[131072]{0}', space=vmem, size = 0x20000, scoped, tag = 'input window, operand 1, single buffered']
    #allocation6 [shape = 's32[1]{0}', space=sflag, size = 0x4, scoped, tag = 'scoped memory for tpu_custom_call.1']
    #allocation7 [shape = 'u8[4096]{0}', space=vmem, size = 0x1000, scoped, tag = 'input window, operand 2, single buffered']
    #allocation8 [shape = 'u8[4096]{0}', space=vmem, size = 0x1000, scoped, tag = 'output window, operand 0, single buffered']
    %8 = vsyncpa [#allocation3], 0
    %9 = vsyncpa [#allocation6], 0
    %10 = vsyncpa [#allocation4], 0
    // Predicated region
    $region2: #{tpu_custom_call.1} parent=1 // pred_check
      _
    $region3: #{tpu_custom_call.1} parent=1 // pred_check_branch
      %12 = sbr.rel (0) target = $region5
    $region4: #{tpu_custom_call.1} parent=1 // pred_region
      %s14 = ssub.s32 64, 64
      %15 = vsyncadd [#allocation3], %s14
      %s17 = sshll.u32 [#allocation2], 4
      %s18 = int_to_ptr.vmem [resolvable:$true] %s17
      %20 = dma.hbm_to_vmem [thread:$0]  %s0, 64, %s18, [#allocation3]
    $region5: #{tpu_custom_call.1} parent=1 // pred_fallthru
      _
    // Predicated region
    $region6: #{tpu_custom_call.1} parent=1 // pred_check
      _
    $region7: #{tpu_custom_call.1} parent=1 // pred_check_branch
      %22 = sbr.rel (0) target = $region9
    $region8: #{tpu_custom_call.1} parent=1 // pred_region
      %s24 = ssub.s32 4096, 4096
      %25 = vsyncadd [#allocation6], %s24
      %s26 = sshll.u32 [#allocation5], 4
      %s27 = int_to_ptr.vmem [resolvable:$true] %s26
      %32 = dma.hbm_to_vmem [thread:$0]  %s1, 4096, %s27, [#allocation6], 64, 64, 4
    $region9: #{tpu_custom_call.1} parent=1 // pred_fallthru
      _
    // Predicated region
    $region10: #{tpu_custom_call.1} parent=1 // pred_check
      _
    $region11: #{tpu_custom_call.1} parent=1 // pred_check_branch
      %34 = sbr.rel (0) target = $region13
    $region12: #{tpu_custom_call.1} parent=1 // pred_region
      %s36 = ssub.s32 128, 128
      %37 = vsyncadd [#allocation6], %s36
      %s39 = sshll.u32 [#allocation7], 4
      %s40 = int_to_ptr.vmem [resolvable:$true] %s39
      %42 = dma.hbm_to_vmem [thread:$0]  %s2, 128, %s40, [#allocation6]
    $region13: #{tpu_custom_call.1} parent=1 // pred_fallthru
      _
    // Predicated region
    $region14: #{tpu_custom_call.1} parent=1 // pred_check
      _
    $region15: #{tpu_custom_call.1} parent=1 // pred_check_branch
      %44 = sbr.rel (0) target = $region17
    $region16: #{tpu_custom_call.1} parent=1 // pred_region
      %45 = dma.done [#allocation3], 64
    $region17: #{tpu_custom_call.1} parent=1 // pred_fallthru
      _
    // Predicated region
    $region18: #{tpu_custom_call.1} parent=1 // pred_check
      _
    $region19: #{tpu_custom_call.1} parent=1 // pred_check_branch
      %47 = sbr.rel (0) target = $region21
    $region20: #{tpu_custom_call.1} parent=1 // pred_region
      %48 = dma.done [#allocation6], 4096
    $region21: #{tpu_custom_call.1} parent=1 // pred_fallthru
      _
    // Predicated region
    $region22: #{tpu_custom_call.1} parent=1 // pred_check
      _
    $region23: #{tpu_custom_call.1} parent=1 // pred_check_branch
      %50 = sbr.rel (0) target = $region25
    $region24: #{tpu_custom_call.1} parent=1 // pred_region
      %51 = dma.done [#allocation6], 128
    $region25: #{tpu_custom_call.1} parent=1 // pred_fallthru
      _
    %v53 = vld [vmem:[#allocation2] sm:$0xf]
    %v54 = vld [vmem:[#allocation7] sm:$0xff]
    %v55 = vld [vmem:[#allocation5] sm:$0xf]
    %v56 = vld [vmem:[#allocation5 + $0x4] sm:$0xf]
    %v57 = vlaneseq
    %v58 = vshrl.u32 %v57, 7
    %v59 = vsub.s32 0, %v58
    %v60 = vrot.slane %v54, %v59
    %v63 = vunpack.c.l.b16 %v55
    %v64 = vunpack.c.l.b16 %v56
    %v65 = vpack.c.b16 %v64, %v63
    %vm67 = vcmask 130048
    %v69 = vsel %vm67, %v53, 0
    %71 = vmatprep.subr.bf16.mxu0 0
    %72 = vmatpush1.bf16.msra.mxu0 0
    %73 = vmatprep.subr.bf16.mxu0 0
    %74 = vmatpush1.bf16.msra.mxu0 0
    %75 = vmatprep.subr.bf16.mxu0 0
    %76 = vmatpush1.bf16.msra.mxu0 0
    %77 = vmatprep.subr.bf16.mxu0 0
    %78 = vmatpush1.bf16.msra.mxu0 0
    %79 = vmatprep.subr.bf16.mxu0 0
    %80 = vmatpush1.bf16.msra.mxu0 0
    %81 = vmatprep.subr.bf16.mxu0 0
    %82 = vmatpush1.bf16.msra.mxu0 0
    %83 = vmatprep.subr.bf16.mxu0 0
    %84 = vmatpush1.bf16.msra.mxu0 0
    %85 = vmatprep.subr.bf16.mxu0 0
    %86 = vmatpush1.bf16.msra.mxu0 %v65
    %87 = vmatprep.subr.bf16.mxu0 0
    %88 = vmatpush2.bf16.msra.mxu0 0
    %89 = vmatprep.subr.bf16.mxu0 0
    %90 = vmatpush2.bf16.msra.mxu0 0
    %91 = vmatprep.subr.bf16.mxu0 0
    %92 = vmatpush2.bf16.msra.mxu0 0
    %93 = vmatprep.subr.bf16.mxu0 0
    %94 = vmatpush2.bf16.msra.mxu0 0
    %95 = vmatprep.subr.bf16.mxu0 0
    %96 = vmatpush2.bf16.msra.mxu0 0
    %97 = vmatprep.subr.bf16.mxu0 0
    %98 = vmatpush2.bf16.msra.mxu0 0
    %99 = vmatprep.subr.bf16.mxu0 0
    %100 = vmatpush2.bf16.msra.mxu0 0
    %101 = vmatprep.subr.bf16.mxu0 0
    %102 = vmatpush2.bf16.msra.mxu0 0
    %103 = vmatprep.mubr.bf16.mxu0 0
    %104 = vmatmul.mubr.bf16.gmra.mxu0 %v69
    %v105 = vpop.f32.mrf.mxu0
    %v106 = vadd.f32 %v60, %v105
    %v107 = vpop.f32.mrf.mxu0
    %v108 = vpop.f32.mrf.mxu0
    %v109 = vpop.f32.mrf.mxu0
    %110 = vdwg.mxu0
    %v111 = vmax.f32 %v106, 0.0
    %v112 = vpack.c.bf16 %v111, %v111
    %s113 = scalar_lea.vmem [#allocation5], 64
    %v114 = vld [vmem:[%s113] sm:$0xf]
    %v115 = vld [vmem:[%s113 + $0x4] sm:$0xf]
    %v116 = vld [vmem:[%s113 + $0x8] sm:$0xf]
    %v117 = vld [vmem:[%s113 + $0xc] sm:$0xf]
    %v118 = vld [vmem:[%s113 + $0x10] sm:$0xf]
    %v119 = vld [vmem:[%s113 + $0x14] sm:$0xf]
    %v120 = vld [vmem:[%s113 + $0x18] sm:$0xf]
    %v121 = vld [vmem:[%s113 + $0x1c] sm:$0xf]
    %v122 = vld [vmem:[%s113 + $0x20] sm:$0xf]
    %v123 = vld [vmem:[%s113 + $0x24] sm:$0xf]
    %v124 = vld [vmem:[%s113 + $0x28] sm:$0xf]
    %v125 = vld [vmem:[%s113 + $0x2c] sm:$0xf]
    %v126 = vld [vmem:[%s113 + $0x30] sm:$0xf]
    %v127 = vld [vmem:[%s113 + $0x34] sm:$0xf]
    %v128 = vld [vmem:[%s113 + $0x38] sm:$0xf]
    %v129 = vld [vmem:[%s113 + $0x3c] sm:$0xf]
    %v130 = vlaneseq
    %v131 = vshrl.u32 %v130, 7
    %v132 = vsub.s32 1, %v131
    %v133 = vrot.slane %v54, %v132
    %v150 = vunpack.c.l.b16 %v114
    %v151 = vunpack.c.l.b16 %v115
    %v152 = vunpack.c.l.b16 %v116
    %v153 = vunpack.c.l.b16 %v117
    %v154 = vunpack.c.l.b16 %v118
    %v155 = vunpack.c.l.b16 %v119
    %v156 = vunpack.c.l.b16 %v120
    %v157 = vunpack.c.l.b16 %v121
    %v158 = vunpack.c.l.b16 %v122
    %v159 = vunpack.c.l.b16 %v123
    %v160 = vunpack.c.l.b16 %v124
    %v161 = vunpack.c.l.b16 %v125
    %v162 = vunpack.c.l.b16 %v126
    %v163 = vunpack.c.l.b16 %v127
    %v164 = vunpack.c.l.b16 %v128
    %v165 = vunpack.c.l.b16 %v129
    %v166 = vpack.c.b16 %v151, %v150
    %v167 = vpack.c.b16 %v153, %v152
    %v168 = vpack.c.b16 %v155, %v154
    %v169 = vpack.c.b16 %v157, %v156
    %v170 = vpack.c.b16 %v159, %v158
    %v171 = vpack.c.b16 %v161, %v160
    %v172 = vpack.c.b16 %v163, %v162
    %v173 = vpack.c.b16 %v165, %v164
    %182 = vmatprep.subr.bf16.mxu0 0
    %183 = vmatpush1.bf16.msra.mxu0 %v173
    %184 = vmatprep.subr.bf16.mxu0 0
    %185 = vmatpush1.bf16.msra.mxu0 %v172
    %186 = vmatprep.subr.bf16.mxu0 0
    %187 = vmatpush1.bf16.msra.mxu0 %v171
    %188 = vmatprep.subr.bf16.mxu0 0
    %189 = vmatpush1.bf16.msra.mxu0 %v170
    %190 = vmatprep.subr.bf16.mxu0 0
    %191 = vmatpush1.bf16.msra.mxu0 %v169
    %192 = vmatprep.subr.bf16.mxu0 0
    %193 = vmatpush1.bf16.msra.mxu0 %v168
    %194 = vmatprep.subr.bf16.mxu0 0
    %195 = vmatpush1.bf16.msra.mxu0 %v167
    %196 = vmatprep.subr.bf16.mxu0 0
    %197 = vmatpush1.bf16.msra.mxu0 %v166
    %198 = vmatprep.subr.bf16.mxu0 0
    %199 = vmatpush2.bf16.msra.mxu0 0
    %200 = vmatprep.subr.bf16.mxu0 0
    %201 = vmatpush2.bf16.msra.mxu0 0
    %202 = vmatprep.subr.bf16.mxu0 0
    %203 = vmatpush2.bf16.msra.mxu0 0
    %204 = vmatprep.subr.bf16.mxu0 0
    %205 = vmatpush2.bf16.msra.mxu0 0
    %206 = vmatprep.subr.bf16.mxu0 0
    %207 = vmatpush2.bf16.msra.mxu0 0
    %208 = vmatprep.subr.bf16.mxu0 0
    %209 = vmatpush2.bf16.msra.mxu0 0
    %210 = vmatprep.subr.bf16.mxu0 0
    %211 = vmatpush2.bf16.msra.mxu0 0
    %212 = vmatprep.subr.bf16.mxu0 0
    %213 = vmatpush2.bf16.msra.mxu0 0
    %214 = vmatprep.mubr.bf16.mxu0 0
    %215 = vmatmul.mubr.bf16.gmra.mxu0 %v112
    %v216 = vpop.f32.mrf.mxu0
    %v217 = vadd.f32 %v133, %v216
    %v218 = vpop.f32.mrf.mxu0
    %v219 = vpop.f32.mrf.mxu0
    %v220 = vpop.f32.mrf.mxu0
    %221 = vdwg.mxu0
    %v222 = vmax.f32 %v217, 0.0
    %v223 = vpack.c.bf16 %v222, %v222
    %s224 = scalar_lea.vmem [#allocation5], 128
    %v225 = vld [vmem:[%s224] sm:$0xf]
    %v226 = vld [vmem:[%s224 + $0x4] sm:$0xf]
    %v227 = vld [vmem:[%s224 + $0x8] sm:$0xf]
    %v228 = vld [vmem:[%s224 + $0xc] sm:$0xf]
    %v229 = vld [vmem:[%s224 + $0x10] sm:$0xf]
    %v230 = vld [vmem:[%s224 + $0x14] sm:$0xf]
    %v231 = vld [vmem:[%s224 + $0x18] sm:$0xf]
    %v232 = vld [vmem:[%s224 + $0x1c] sm:$0xf]
    %v233 = vld [vmem:[%s224 + $0x20] sm:$0xf]
    %v234 = vld [vmem:[%s224 + $0x24] sm:$0xf]
    %v235 = vld [vmem:[%s224 + $0x28] sm:$0xf]
    %v236 = vld [vmem:[%s224 + $0x2c] sm:$0xf]
    %v237 = vld [vmem:[%s224 + $0x30] sm:$0xf]
    %v238 = vld [vmem:[%s224 + $0x34] sm:$0xf]
    %v239 = vld [vmem:[%s224 + $0x38] sm:$0xf]
    %v240 = vld [vmem:[%s224 + $0x3c] sm:$0xf]
    %v241 = vlaneseq
    %v242 = vshrl.u32 %v241, 7
    %v243 = vsub.s32 2, %v242
    %v244 = vrot.slane %v54, %v243
    %v261 = vunpack.c.l.b16 %v225
    %v262 = vunpack.c.l.b16 %v226
    %v263 = vunpack.c.l.b16 %v227
    %v264 = vunpack.c.l.b16 %v228
    %v265 = vunpack.c.l.b16 %v229
    %v266 = vunpack.c.l.b16 %v230
    %v267 = vunpack.c.l.b16 %v231
    %v268 = vunpack.c.l.b16 %v232
    %v269 = vunpack.c.l.b16 %v233
    %v270 = vunpack.c.l.b16 %v234
    %v271 = vunpack.c.l.b16 %v235
    %v272 = vunpack.c.l.b16 %v236
    %v273 = vunpack.c.l.b16 %v237
    %v274 = vunpack.c.l.b16 %v238
    %v275 = vunpack.c.l.b16 %v239
    %v276 = vunpack.c.l.b16 %v240
    %v277 = vpack.c.b16 %v262, %v261
    %v278 = vpack.c.b16 %v264, %v263
    %v279 = vpack.c.b16 %v266, %v265
    %v280 = vpack.c.b16 %v268, %v267
    %v281 = vpack.c.b16 %v270, %v269
    %v282 = vpack.c.b16 %v272, %v271
    %v283 = vpack.c.b16 %v274, %v273
    %v284 = vpack.c.b16 %v276, %v275
    %293 = vmatprep.subr.bf16.mxu0 0
    %294 = vmatpush1.bf16.msra.mxu0 %v284
    %295 = vmatprep.subr.bf16.mxu0 0
    %296 = vmatpush1.bf16.msra.mxu0 %v283
    %297 = vmatprep.subr.bf16.mxu0 0
    %298 = vmatpush1.bf16.msra.mxu0 %v282
    %299 = vmatprep.subr.bf16.mxu0 0
    %300 = vmatpush1.bf16.msra.mxu0 %v281
    %301 = vmatprep.subr.bf16.mxu0 0
    %302 = vmatpush1.bf16.msra.mxu0 %v280
    %303 = vmatprep.subr.bf16.mxu0 0
    %304 = vmatpush1.bf16.msra.mxu0 %v279
    %305 = vmatprep.subr.bf16.mxu0 0
    %306 = vmatpush1.bf16.msra.mxu0 %v278
    %307 = vmatprep.subr.bf16.mxu0 0
    %308 = vmatpush1.bf16.msra.mxu0 %v277
    %309 = vmatprep.subr.bf16.mxu0 0
    %310 = vmatpush2.bf16.msra.mxu0 0
    %311 = vmatprep.subr.bf16.mxu0 0
    %312 = vmatpush2.bf16.msra.mxu0 0
    %313 = vmatprep.subr.bf16.mxu0 0
    %314 = vmatpush2.bf16.msra.mxu0 0
    %315 = vmatprep.subr.bf16.mxu0 0
    %316 = vmatpush2.bf16.msra.mxu0 0
    %317 = vmatprep.subr.bf16.mxu0 0
    %318 = vmatpush2.bf16.msra.mxu0 0
    %319 = vmatprep.subr.bf16.mxu0 0
    %320 = vmatpush2.bf16.msra.mxu0 0
    %321 = vmatprep.subr.bf16.mxu0 0
    %322 = vmatpush2.bf16.msra.mxu0 0
    %323 = vmatprep.subr.bf16.mxu0 0
    %324 = vmatpush2.bf16.msra.mxu0 0
    %325 = vmatprep.mubr.bf16.mxu0 0
    %326 = vmatmul.mubr.bf16.gmra.mxu0 %v223
    %v327 = vpop.f32.mrf.mxu0
    %v328 = vadd.f32 %v244, %v327
    %v329 = vpop.f32.mrf.mxu0
    %v330 = vpop.f32.mrf.mxu0
    %v331 = vpop.f32.mrf.mxu0
    %332 = vdwg.mxu0
    %v333 = vmax.f32 %v328, 0.0
    %v334 = vpack.c.bf16 %v333, %v333
    %s335 = scalar_lea.vmem [#allocation5], 192
    %v336 = vld [vmem:[%s335] sm:$0xf]
    %v337 = vld [vmem:[%s335 + $0x4] sm:$0xf]
    %v338 = vld [vmem:[%s335 + $0x8] sm:$0xf]
    %v339 = vld [vmem:[%s335 + $0xc] sm:$0xf]
    %v340 = vld [vmem:[%s335 + $0x10] sm:$0xf]
    %v341 = vld [vmem:[%s335 + $0x14] sm:$0xf]
    %v342 = vld [vmem:[%s335 + $0x18] sm:$0xf]
    %v343 = vld [vmem:[%s335 + $0x1c] sm:$0xf]
    %v344 = vld [vmem:[%s335 + $0x20] sm:$0xf]
    %v345 = vld [vmem:[%s335 + $0x24] sm:$0xf]
    %v346 = vld [vmem:[%s335 + $0x28] sm:$0xf]
    %v347 = vld [vmem:[%s335 + $0x2c] sm:$0xf]
    %v348 = vld [vmem:[%s335 + $0x30] sm:$0xf]
    %v349 = vld [vmem:[%s335 + $0x34] sm:$0xf]
    %v350 = vld [vmem:[%s335 + $0x38] sm:$0xf]
    %v351 = vld [vmem:[%s335 + $0x3c] sm:$0xf]
    %v352 = vlaneseq
    %v353 = vshrl.u32 %v352, 7
    %v354 = vsub.s32 3, %v353
    %v355 = vrot.slane %v54, %v354
    %v372 = vunpack.c.l.b16 %v336
    %v373 = vunpack.c.l.b16 %v337
    %v374 = vunpack.c.l.b16 %v338
    %v375 = vunpack.c.l.b16 %v339
    %v376 = vunpack.c.l.b16 %v340
    %v377 = vunpack.c.l.b16 %v341
    %v378 = vunpack.c.l.b16 %v342
    %v379 = vunpack.c.l.b16 %v343
    %v380 = vunpack.c.l.b16 %v344
    %v381 = vunpack.c.l.b16 %v345
    %v382 = vunpack.c.l.b16 %v346
    %v383 = vunpack.c.l.b16 %v347
    %v384 = vunpack.c.l.b16 %v348
    %v385 = vunpack.c.l.b16 %v349
    %v386 = vunpack.c.l.b16 %v350
    %v387 = vunpack.c.l.b16 %v351
    %v388 = vpack.c.b16 %v373, %v372
    %v389 = vpack.c.b16 %v375, %v374
    %v390 = vpack.c.b16 %v377, %v376
    %v391 = vpack.c.b16 %v379, %v378
    %v392 = vpack.c.b16 %v381, %v380
    %v393 = vpack.c.b16 %v383, %v382
    %v394 = vpack.c.b16 %v385, %v384
    %v395 = vpack.c.b16 %v387, %v386
    %404 = vmatprep.subr.bf16.mxu0 0
    %405 = vmatpush1.bf16.msra.mxu0 %v395
    %406 = vmatprep.subr.bf16.mxu0 0
    %407 = vmatpush1.bf16.msra.mxu0 %v394
    %408 = vmatprep.subr.bf16.mxu0 0
    %409 = vmatpush1.bf16.msra.mxu0 %v393
    %410 = vmatprep.subr.bf16.mxu0 0
    %411 = vmatpush1.bf16.msra.mxu0 %v392
    %412 = vmatprep.subr.bf16.mxu0 0
    %413 = vmatpush1.bf16.msra.mxu0 %v391
    %414 = vmatprep.subr.bf16.mxu0 0
    %415 = vmatpush1.bf16.msra.mxu0 %v390
    %416 = vmatprep.subr.bf16.mxu0 0
    %417 = vmatpush1.bf16.msra.mxu0 %v389
    %418 = vmatprep.subr.bf16.mxu0 0
    %419 = vmatpush1.bf16.msra.mxu0 %v388
    %420 = vmatprep.subr.bf16.mxu0 0
    %421 = vmatpush2.bf16.msra.mxu0 0
    %422 = vmatprep.subr.bf16.mxu0 0
    %423 = vmatpush2.bf16.msra.mxu0 0
    %424 = vmatprep.subr.bf16.mxu0 0
    %425 = vmatpush2.bf16.msra.mxu0 0
    %426 = vmatprep.subr.bf16.mxu0 0
    %427 = vmatpush2.bf16.msra.mxu0 0
    %428 = vmatprep.subr.bf16.mxu0 0
    %429 = vmatpush2.bf16.msra.mxu0 0
    %430 = vmatprep.subr.bf16.mxu0 0
    %431 = vmatpush2.bf16.msra.mxu0 0
    %432 = vmatprep.subr.bf16.mxu0 0
    %433 = vmatpush2.bf16.msra.mxu0 0
    %434 = vmatprep.subr.bf16.mxu0 0
    %435 = vmatpush2.bf16.msra.mxu0 0
    %436 = vmatprep.mubr.bf16.mxu0 0
    %437 = vmatmul.mubr.bf16.gmra.mxu0 %v334
    %v438 = vpop.f32.mrf.mxu0
    %v439 = vadd.f32 %v355, %v438
    %v440 = vpop.f32.mrf.mxu0
    %v441 = vpop.f32.mrf.mxu0
    %v442 = vpop.f32.mrf.mxu0
    %443 = vdwg.mxu0
    %v444 = vlaneseq
    %v445 = vand.u32 %v444, 127
    %vm446 = vcmp.lt.s32.totalorder %v445, 8
    %v447 = vsel %vm446, %v439, -1e+30
    %448 = vmax.xlane.f32.xlu0 %v447
    %v449 = vpop.xlane.xlu0 %448
    %v450 = vsub.f32 %v447, %v449
    %v451 = vmul.f32 %v450, 1.442695
    %v452 = vpow.pop %v451
    %453 = vadd.xlane.f32.xlu0 %v452
    %v454 = vpop.xlane.xlu0 %453
    %v455 = vrcp.pop %v454
    %v456 = vmul.f32 %v452, %v455
    %v457 = vtanh.pop %v439
    %vm458 = vcmp.eq.s32.totalorder %v445, 8
    %v459 = vsel %vm458, %v457, 0.0
    %v460 = vsel %vm446, %v456, %v459
    %461 = vst.msk [vmem:[#allocation8] sm:$0xff] %vm67, %v460
    // Predicated region
    $region26: #{tpu_custom_call.1} parent=1 // pred_check
      _
    $region27: #{tpu_custom_call.1} parent=1 // pred_check_branch
      %463 = sbr.rel (0) target = $region29
    $region28: #{tpu_custom_call.1} parent=1 // pred_region
      %s465 = ssub.s32 128, 128
      %466 = vsyncadd [#allocation4], %s465
      %s468 = sshll.u32 [#allocation8], 4
      %s469 = int_to_ptr.vmem [resolvable:$true] %s468
      %471 = dma.vmem_to_hbm [thread:$0]  %s469, 128, %s3, [#allocation4]
    $region29: #{tpu_custom_call.1} parent=1 // pred_fallthru
      _
    // Predicated region
    $region30: #{tpu_custom_call.1} parent=1 // pred_check
      _
    $region31: #{tpu_custom_call.1} parent=1 // pred_check_branch
      %473 = sbr.rel (0) target = $region33
    $region32: #{tpu_custom_call.1} parent=1 // pred_region
      %474 = dma.done [#allocation4], 128
    $region33: #{tpu_custom_call.1} parent=1 // pred_fallthru
      _
    %475 = vsyncpa [#allocation3], 1
    %476 = vsyncpa [#allocation6], 1
    %477 = vsyncpa [#allocation4], 1

</llo_original>
